<compile_context>
chip_gen: v7x
topology: tpu7x:2x2x1
jax: 0.10.0
libtpu: 0.0.40
codegen_flags: <defaults>
</compile_context>

<pallas_src>
import functools

import jax
import jax.numpy as jnp
from jax.experimental import pallas as pl
from jax.experimental.pallas import tpu as pltpu


def _rmsnorm_kernel(x_ref, w_ref, o_ref, *, eps):
    # x_ref: (ROW_TILE, D)   w_ref: (1, D)   o_ref: (ROW_TILE, D)
    x = x_ref[...].astype(jnp.float32)
    ms = jnp.mean(x * x, axis=-1, keepdims=True)          # (ROW_TILE, 1)
    inv = jax.lax.rsqrt(ms + eps)                         # EUP rsqrt (cheap)
    # Fused store: only `x` stays live as a full fp32 tile (keeps VMEM temps
    # low so the row tile can be larger, esp. on v7x's 64 MiB VMEM).
    o_ref[...] = ((x * inv) * w_ref[...].astype(jnp.float32)).astype(o_ref.dtype)


def _rmsnorm_folded_kernel(x_ref, w_ref, o_ref, *, eps, d, shift):
    # Lane-dense path for small d_model: g = 128 // d rows are folded per
    # 128-lane group, so x_ref is (ROW_TILE, 128) and every vreg / store is
    # lane-dense. The per-original-row sum of squares is computed with a
    # block-diagonal indicator matmul on the MXU (free: the op is HBM-bound),
    # which both reduces within each d-lane group and broadcasts the result
    # back across the group's lanes.
    gd = x_ref.shape[-1]                                   # == 128
    x = x_ref[...].astype(jnp.float32)                     # (rt, 128)
    ii = jax.lax.broadcasted_iota(jnp.int32, (gd, gd), 0) >> shift
    jj = jax.lax.broadcasted_iota(jnp.int32, (gd, gd), 1) >> shift
    m = (ii == jj).astype(jnp.float32)                     # block-diag ones
    ssq = jnp.dot(x * x, m, preferred_element_type=jnp.float32)   # (rt, 128)
    inv = jax.lax.rsqrt(ssq * (1.0 / d) + eps)
    o_ref[...] = ((x * inv) * w_ref[...].astype(jnp.float32)).astype(o_ref.dtype)


def _vmem_policy():
    """Generation-aware (tile_target_bytes, vmem_budget_bytes)."""
    try:
        cap = int(pltpu.get_tpu_info().vmem_capacity_bytes)
    except Exception:  # pragma: no cover - conservative fallback
        cap = 64 << 20
    if cap >= (100 << 20):
        # v5e / v6e: 128 MiB physical VMEM per TensorCore. Big tiles, big limit.
        return 12 << 20, 96 << 20
    # v7x (64 MiB per TensorCore) or unknown: tighter budget, ~7 MiB tiles.
    return 7 << 20, 52 << 20


def _choose_row_tile(rows, d, dtype, tile_target_bytes, vmem_budget):
    """Row tile sized by an input-dtype DMA byte budget per grid step, bounded
    by the VMEM budget (double-buffered in/out + fp32 temps) and a grid-length
    floor so the pipeline has enough steps to overlap."""
    itemsize = jnp.dtype(dtype).itemsize
    sublane = max(8, 32 // itemsize)          # 8 for f32, 16 for bf16, 32 for i8
    if rows <= sublane:
        return rows                           # single block == full row extent

    row_io = d * itemsize
    row_f32 = d * 4
    # Per-row VMEM footprint: double-buffered input + output tiles + ~2 fp32
    # temps (the fused body keeps live temps to about x + one product slab).
    per_row = 2 * row_io + 2 * row_io + 2 * row_f32
    rt_budget = max(sublane, int((vmem_budget * 8 // 10) // per_row))
    rt_target = max(sublane, tile_target_bytes // row_io)
    # Keep >= ~8 grid steps (>= 4 per TensorCore on v7x) for DMA/compute overlap.
    rt_steps = ((pl.cdiv(rows, 8) + sublane - 1) // sublane) * sublane

    rt = min(rt_target, rt_budget, rt_steps, rows)
    rt = max((rt // sublane) * sublane, sublane)
    rt = min(rt, rows)

    # Prefer an even grid-step count (clean split across v7x's 2 TensorCores).
    steps = pl.cdiv(rows, rt)
    if steps > 2 and steps % 2 == 1:
        rt_alt = max(((pl.cdiv(rows, steps + 1) + sublane - 1) // sublane) * sublane,
                     sublane)
        if rt_alt <= rt and pl.cdiv(rows, rt_alt) % 2 == 0:
            rt = rt_alt
    return rt


def rmsnorm(x, weight, eps=1e-5, row_tile=None):
    """RMSNorm over the last axis of x. weight has shape (d_model,)."""
    orig_shape = x.shape
    d_model = orig_shape[-1]
    x2d = x.reshape(-1, d_model)
    rows = x2d.shape[0]
    itemsize = jnp.dtype(x.dtype).itemsize

    tile_target_bytes, vmem_budget = _vmem_policy()

    # Lane-density guard: fold g rows per 128-lane group when d_model < 128.
    g = 1
    if d_model < 128 and 128 % d_model == 0 and rows % (128 // d_model) == 0:
        g = 128 // d_model

    if g > 1:
        d_eff = g * d_model                                 # == 128
        rows_eff = rows // g
        x_in = x2d.reshape(rows_eff, d_eff)                 # row-major: pure view
        w_in = jnp.tile(weight.reshape(1, d_model), (1, g))
        kernel = functools.partial(_rmsnorm_folded_kernel, eps=float(eps),
                                   d=d_model, shift=int(d_model).bit_length() - 1)
    else:
        d_eff = d_model
        rows_eff = rows
        x_in = x2d
        w_in = weight.reshape(1, d_model)
        kernel = functools.partial(_rmsnorm_kernel, eps=float(eps))

    if row_tile is None:
        row_tile = _choose_row_tile(rows_eff, d_eff, x.dtype,
                                    tile_target_bytes, vmem_budget)
    row_tile = max(1, min(row_tile, rows_eff))

    # Ragged last block is fine: normalization is per-row; out-of-range rows of
    # the last block are computed on garbage but never written back.
    grid = (pl.cdiv(rows_eff, row_tile),)

    tile_io = row_tile * d_eff * itemsize
    tile_f32 = row_tile * d_eff * 4
    needed = 2 * (2 * tile_io) + 2 * tile_f32 + (1 << 20)
    vmem_limit = int(min(vmem_budget, max(32 << 20, int(1.25 * needed))))

    cost = pl.CostEstimate(
        flops=4 * rows * d_model,
        transcendentals=rows,
        bytes_accessed=2 * rows * d_model * itemsize
        + d_model * jnp.dtype(weight.dtype).itemsize,
    )

    out = pl.pallas_call(
        kernel,
        out_shape=jax.ShapeDtypeStruct((rows_eff, d_eff), x.dtype),
        grid_spec=pltpu.PrefetchScalarGridSpec(
            num_scalar_prefetch=0,
            grid=grid,
            in_specs=[
                pl.BlockSpec((row_tile, d_eff), lambda i: (i, 0)),
                pl.BlockSpec((1, d_eff), lambda i: (0, 0)),
            ],
            out_specs=pl.BlockSpec((row_tile, d_eff), lambda i: (i, 0)),
        ),
        compiler_params=pltpu.CompilerParams(
            dimension_semantics=("parallel",),
            vmem_limit_bytes=vmem_limit,
        ),
        cost_estimate=cost,
    )(x_in, w_in)

    return out.reshape(orig_shape)


def _ref_rmsnorm(x, weight, eps):
    return x / jnp.sqrt(jnp.mean(x ** 2, axis=-1, keepdims=True) + eps) * weight


if __name__ == "__main__":
    key = jax.random.PRNGKey(0)
    eps = 1e-5

    # Shapes matching the module: (batch=2, seq=8, d_model=32).
    batch, seq, d_model = 2, 8, 32
    x = jax.random.normal(key, (batch, seq, d_model), dtype=jnp.float32)
    weight = jnp.ones((d_model,), dtype=jnp.float32)   # PyTorch init: ones.

    out = jax.block_until_ready(rmsnorm(x, weight, eps=eps))   # folded lane-dense path
    ref = _ref_rmsnorm(x, weight, eps)
    assert jnp.allclose(out, ref, atol=1e-5, rtol=1e-5), "mismatch vs reference"

    # Ragged / non-foldable row count exercises the plain path + ragged grid.
    x2 = jax.random.normal(jax.random.PRNGKey(1), (3, 5, d_model), dtype=jnp.float32)
    out2 = jax.block_until_ready(rmsnorm(x2, weight, eps=eps))
    ref2 = _ref_rmsnorm(x2, weight, eps)
    assert jnp.allclose(out2, ref2, atol=1e-5, rtol=1e-5), "mismatch vs reference (ragged)"

    # d_model >= 128 exercises the standard lane-dense path with multiple steps.
    d3 = 256
    x3 = jax.random.normal(jax.random.PRNGKey(2), (4, 16, d3), dtype=jnp.float32)
    w3 = jnp.ones((d3,), dtype=jnp.float32)
    out3 = jax.block_until_ready(rmsnorm(x3, w3, eps=eps))
    ref3 = _ref_rmsnorm(x3, w3, eps)
    assert jnp.allclose(out3, ref3, atol=1e-5, rtol=1e-5), "mismatch vs reference (d=256)"

    print("KERNEL_OK")
</pallas_src>

<mosaic_0001>
module attributes {stable_mosaic.version = 11 : i64} {
  func.func @_rmsnorm_folded_kernel(%arg0: i32, %arg1: memref<4x128xf32, #tpu.memory_space<vmem>>, %arg2: memref<1x128xf32, #tpu.memory_space<vmem>>, %arg3: memref<4x128xf32, #tpu.memory_space<vmem>>) attributes {dimension_semantics = [#tpu.dimension_semantics<parallel>], iteration_bounds = array<i64: 1>, scalar_prefetch = 0 : i64, scratch_operands = 0 : i64, tpu.core_type = #tpu.core_type<tc>, window_params = [{transform_indices = @transform_0, window_bounds = array<i64: 4, 128>}, {pipeline_mode = #tpu.pipeline_mode<synchronous>, transform_indices = @transform_1, window_bounds = array<i64: 1, 128>}, {transform_indices = @transform_2, window_bounds = array<i64: 4, 128>}]} {
    %c0 = arith.constant 0 : index
    %c0_0 = arith.constant 0 : index
    %0 = vector.load %arg1[%c0, %c0_0] : memref<4x128xf32, #tpu.memory_space<vmem>>, vector<4x128xf32>
    %1 = tpu.iota {dimensions = array<i32: 0>} : vector<128x128xi32>
    %c5_i32 = arith.constant 5 : i32
    %2 = vector.broadcast %c5_i32 : i32 to vector<128x128xi32>
    %3 = arith.shrsi %1, %2 : vector<128x128xi32>
    %4 = tpu.iota {dimensions = array<i32: 1>} : vector<128x128xi32>
    %c5_i32_1 = arith.constant 5 : i32
    %5 = vector.broadcast %c5_i32_1 : i32 to vector<128x128xi32>
    %6 = arith.shrsi %4, %5 : vector<128x128xi32>
    %7 = arith.cmpi eq, %3, %6 : vector<128x128xi32>
    %8 = arith.extui %7 : vector<128x128xi1> to vector<128x128xi32>
    %9 = arith.sitofp %8 : vector<128x128xi32> to vector<128x128xf32>
    %10 = arith.mulf %0, %0 : vector<4x128xf32>
    %cst = arith.constant dense<0.000000e+00> : vector<4x128xf32>
    %11 = tpu.matmul %10, %9, %cst {dimension_numbers = #tpu.dot_dimension_numbers<[1], [0], [0], [1], [0, 0, 1, 1], [], []>} : vector<4x128xf32>, vector<128x128xf32>, vector<4x128xf32> -> vector<4x128xf32>
    %cst_2 = arith.constant 3.125000e-02 : f32
    %12 = vector.broadcast %cst_2 : f32 to vector<4x128xf32>
    %13 = arith.mulf %11, %12 : vector<4x128xf32>
    %cst_3 = arith.constant 9.99999974E-6 : f32
    %14 = vector.broadcast %cst_3 : f32 to vector<4x128xf32>
    %15 = arith.addf %13, %14 : vector<4x128xf32>
    %16 = math.rsqrt %15 : vector<4x128xf32>
    %17 = arith.mulf %0, %16 : vector<4x128xf32>
    %c0_4 = arith.constant 0 : index
    %c0_5 = arith.constant 0 : index
    %18 = vector.load %arg2[%c0_4, %c0_5] : memref<1x128xf32, #tpu.memory_space<vmem>>, vector<1x128xf32>
    %19 = vector.broadcast %18 : vector<1x128xf32> to vector<4x128xf32>
    %20 = arith.mulf %17, %19 : vector<4x128xf32>
    %c0_6 = arith.constant 0 : index
    %c0_7 = arith.constant 0 : index
    %21 = vector.load %arg3[%c0_6, %c0_7] : memref<4x128xf32, #tpu.memory_space<vmem>>, vector<4x128xf32>
    tpu.vector_store %arg3[%c0_6, %c0_7], %20 {strides = array<i32>} : memref<4x128xf32, #tpu.memory_space<vmem>>, vector<4x128xf32>,
    return
  }
  func.func @transform_0(%arg0: i32) -> (i32, i32) {
    %c0_i32 = arith.constant 0 : i32
    %c0_i32_0 = arith.constant 0 : i32
    return %arg0, %c0_i32 : i32, i32
  }
  func.func @transform_1(%arg0: i32) -> (i32, i32) {
    %c0_i32 = arith.constant 0 : i32
    %c0_i32_0 = arith.constant 0 : i32
    %c0_i32_1 = arith.constant 0 : i32
    return %c0_i32, %c0_i32_0 : i32, i32
  }
  func.func @transform_2(%arg0: i32) -> (i32, i32) {
    %c0_i32 = arith.constant 0 : i32
    %c0_i32_0 = arith.constant 0 : i32
    return %arg0, %c0_i32 : i32, i32
  }
}

</mosaic_0001>

<llo_original>
// kernel: tpu_custom_call.1
$region0: #{tpu_custom_call.1}
  #allocation0 [shape = 'u32[]', space=smem, size = 0x4, offset = 0x4, fixed_abs, tag = 'smem constant byte address 0x4 - core index']
  #allocation1 [shape = 'u32[144,128]{1,0:T(1,128)}', space=vmem, size = 0x12000, scoped, tag = 'internal scratch']
  %s0 = inlined_call_operand.hbm [shape: f32[4,128], index: 0, kind: input, shape index: {}]
  %s1 = inlined_call_operand.vmem [shape: f32[1,128], index: 1, kind: input, shape index: {}]
  %s2 = inlined_call_operand.hbm [shape: f32[4,128], index: 2, kind: output, shape index: {}]
  %s3 = sld [smem:[#allocation0]]
  $region22: #{tpu_custom_call.1} parent=0
    _
  %s5 = ssub.s32 1, %s3
  %s6 = scalar_select 0, %s5, %s3
  $region1: #{tpu_custom_call.1} parent=0
    #allocation2 [shape = 'u8[2048]{0}', space=vmem, size = 0x800, scoped, tag = 'input window, operand 0, single buffered']
    #allocation3 [shape = 's32[1]{0}', space=sflag, size = 0x4, scoped, tag = 'scoped memory for tpu_custom_call.1']
    #allocation4 [shape = 's32[1]{0}', space=sflag, size = 0x4, scoped, tag = 'scoped memory for tpu_custom_call.1']
    #allocation5 [shape = 'u8[2048]{0}', space=vmem, size = 0x800, scoped, tag = 'output window, operand 0, single buffered']
    %7 = vsyncpa [#allocation3], 0
    %8 = vsyncpa [#allocation4], 0
    // Predicated region
    $region2: #{tpu_custom_call.1} parent=1 // pred_check
      _
    $region3: #{tpu_custom_call.1} parent=1 // pred_check_branch
      %10 = sbr.rel (0) target = $region5
    $region4: #{tpu_custom_call.1} parent=1 // pred_region
      %s12 = ssub.s32 64, 64
      %13 = vsyncadd [#allocation3], %s12
      %s15 = sshll.u32 [#allocation2], 4
      %s16 = int_to_ptr.vmem [resolvable:$true] %s15
      %18 = dma.hbm_to_vmem [thread:$0]  %s0, 64, %s16, [#allocation3]
    $region5: #{tpu_custom_call.1} parent=1 // pred_fallthru
      _
    // Predicated region
    $region6: #{tpu_custom_call.1} parent=1 // pred_check
      _
    $region7: #{tpu_custom_call.1} parent=1 // pred_check_branch
      %20 = sbr.rel (0) target = $region9
    $region8: #{tpu_custom_call.1} parent=1 // pred_region
      _
    $region9: #{tpu_custom_call.1} parent=1 // pred_fallthru
      _
    // Predicated region
    $region10: #{tpu_custom_call.1} parent=1 // pred_check
      _
    $region11: #{tpu_custom_call.1} parent=1 // pred_check_branch
      %22 = sbr.rel (0) target = $region13
    $region12: #{tpu_custom_call.1} parent=1 // pred_region
      %23 = dma.done [#allocation3], 64
    $region13: #{tpu_custom_call.1} parent=1 // pred_fallthru
      _
    %v24 = vld [vmem:[#allocation2] sm:$0xf]
    %v25 = vlaneseq
    %v26 = vshrl.u32 %v25, 7
    %v27 = vadd.s32 %v26, 8
    %v28 = vadd.s32 %v26, 16
    %v29 = vadd.s32 %v26, 24
    %v30 = vadd.s32 %v26, 32
    %v31 = vadd.s32 %v26, 40
    %v32 = vadd.s32 %v26, 48
    %v33 = vadd.s32 %v26, 56
    %v34 = vadd.s32 %v26, 64
    %v35 = vadd.s32 %v26, 72
    %v36 = vadd.s32 %v26, 80
    %v37 = vadd.s32 %v26, 88
    %v38 = vadd.s32 %v26, 96
    %v39 = vadd.s32 %v26, 104
    %v40 = vadd.s32 %v26, 112
    %v41 = vadd.s32 %v26, 120
    %v42 = vshra.s32 %v26, 5
    %v43 = vshra.s32 %v27, 5
    %v44 = vshra.s32 %v28, 5
    %v45 = vshra.s32 %v29, 5
    %v46 = vshra.s32 %v30, 5
    %v47 = vshra.s32 %v31, 5
    %v48 = vshra.s32 %v32, 5
    %v49 = vshra.s32 %v33, 5
    %v50 = vshra.s32 %v34, 5
    %v51 = vshra.s32 %v35, 5
    %v52 = vshra.s32 %v36, 5
    %v53 = vshra.s32 %v37, 5
    %v54 = vshra.s32 %v38, 5
    %v55 = vshra.s32 %v39, 5
    %v56 = vshra.s32 %v40, 5
    %v57 = vshra.s32 %v41, 5
    %v58 = vlaneseq
    %v59 = vand.u32 %v58, 127
    %v60 = vshra.s32 %v59, 5
    %vm61 = vcmp.eq.s32.totalorder %v42, %v60
    %vm62 = vcmp.eq.s32.totalorder %v43, %v60
    %vm63 = vcmp.eq.s32.totalorder %v44, %v60
    %vm64 = vcmp.eq.s32.totalorder %v45, %v60
    %vm65 = vcmp.eq.s32.totalorder %v46, %v60
    %vm66 = vcmp.eq.s32.totalorder %v47, %v60
    %vm67 = vcmp.eq.s32.totalorder %v48, %v60
    %vm68 = vcmp.eq.s32.totalorder %v49, %v60
    %vm69 = vcmp.eq.s32.totalorder %v50, %v60
    %vm70 = vcmp.eq.s32.totalorder %v51, %v60
    %vm71 = vcmp.eq.s32.totalorder %v52, %v60
    %vm72 = vcmp.eq.s32.totalorder %v53, %v60
    %vm73 = vcmp.eq.s32.totalorder %v54, %v60
    %vm74 = vcmp.eq.s32.totalorder %v55, %v60
    %vm75 = vcmp.eq.s32.totalorder %v56, %v60
    %vm76 = vcmp.eq.s32.totalorder %v57, %v60
    %v77 = vsel %vm61, 1, 0
    %v78 = vsel %vm62, 1, 0
    %v79 = vsel %vm63, 1, 0
    %v80 = vsel %vm64, 1, 0
    %v81 = vsel %vm65, 1, 0
    %v82 = vsel %vm66, 1, 0
    %v83 = vsel %vm67, 1, 0
    %v84 = vsel %vm68, 1, 0
    %v85 = vsel %vm69, 1, 0
    %v86 = vsel %vm70, 1, 0
    %v87 = vsel %vm71, 1, 0
    %v88 = vsel %vm72, 1, 0
    %v89 = vsel %vm73, 1, 0
    %v90 = vsel %vm74, 1, 0
    %v91 = vsel %vm75, 1, 0
    %v92 = vsel %vm76, 1, 0
    %v93 = vcvt.s32.f32 %v77
    %v94 = vcvt.s32.f32 %v78
    %v95 = vcvt.s32.f32 %v79
    %v96 = vcvt.s32.f32 %v80
    %v97 = vcvt.s32.f32 %v81
    %v98 = vcvt.s32.f32 %v82
    %v99 = vcvt.s32.f32 %v83
    %v100 = vcvt.s32.f32 %v84
    %v101 = vcvt.s32.f32 %v85
    %v102 = vcvt.s32.f32 %v86
    %v103 = vcvt.s32.f32 %v87
    %v104 = vcvt.s32.f32 %v88
    %v105 = vcvt.s32.f32 %v89
    %v106 = vcvt.s32.f32 %v90
    %v107 = vcvt.s32.f32 %v91
    %v108 = vcvt.s32.f32 %v92
    %v109 = vmul.f32 %v24, %v24
    %110 = vmatprep.subr.mxu0 0.0
    %111 = vmatpush1.msra.mxu0 %v93
    %112 = vmatprep.subr.mxu0 0.0
    %113 = vmatpush1.msra.mxu0 %v94
    %114 = vmatprep.subr.mxu0 0.0
    %115 = vmatpush1.msra.mxu0 %v95
    %116 = vmatprep.subr.mxu0 0.0
    %117 = vmatpush1.msra.mxu0 %v96
    %118 = vmatprep.subr.mxu0 0.0
    %119 = vmatpush1.msra.mxu0 %v97
    %120 = vmatprep.subr.mxu0 0.0
    %121 = vmatpush1.msra.mxu0 %v98
    %122 = vmatprep.subr.mxu0 0.0
    %123 = vmatpush1.msra.mxu0 %v99
    %124 = vmatprep.subr.mxu0 0.0
    %125 = vmatpush1.msra.mxu0 %v100
    %126 = vmatprep.subr.mxu0 0.0
    %127 = vmatpush1.msra.mxu0 %v101
    %128 = vmatprep.subr.mxu0 0.0
    %129 = vmatpush1.msra.mxu0 %v102
    %130 = vmatprep.subr.mxu0 0.0
    %131 = vmatpush1.msra.mxu0 %v103
    %132 = vmatprep.subr.mxu0 0.0
    %133 = vmatpush1.msra.mxu0 %v104
    %134 = vmatprep.subr.mxu0 0.0
    %135 = vmatpush1.msra.mxu0 %v105
    %136 = vmatprep.subr.mxu0 0.0
    %137 = vmatpush1.msra.mxu0 %v106
    %138 = vmatprep.subr.mxu0 0.0
    %139 = vmatpush1.msra.mxu0 %v107
    %140 = vmatprep.subr.mxu0 0.0
    %141 = vmatpush1.msra.mxu0 %v108
    %142 = vmatprep.subr.mxu0 0.0
    %143 = vmatpush1.msra.mxu0 0.0
    %144 = vmatprep.subr.mxu0 0.0
    %145 = vmatpush1.msra.mxu0 0.0
    %146 = vmatprep.subr.mxu0 0.0
    %147 = vmatpush1.msra.mxu0 0.0
    %148 = vmatprep.subr.mxu0 0.0
    %149 = vmatpush1.msra.mxu0 0.0
    %150 = vmatprep.subr.mxu0 0.0
    %151 = vmatpush1.msra.mxu0 0.0
    %152 = vmatprep.subr.mxu0 0.0
    %153 = vmatpush1.msra.mxu0 0.0
    %154 = vmatprep.subr.mxu0 0.0
    %155 = vmatpush1.msra.mxu0 0.0
    %156 = vmatprep.subr.mxu0 0.0
    %157 = vmatpush1.msra.mxu0 0.0
    %158 = vmatprep.subr.mxu0 0.0
    %159 = vmatpush1.msra.mxu0 0.0
    %160 = vmatprep.subr.mxu0 0.0
    %161 = vmatpush1.msra.mxu0 0.0
    %162 = vmatprep.subr.mxu0 0.0
    %163 = vmatpush1.msra.mxu0 0.0
    %164 = vmatprep.subr.mxu0 0.0
    %165 = vmatpush1.msra.mxu0 0.0
    %166 = vmatprep.subr.mxu0 0.0
    %167 = vmatpush1.msra.mxu0 0.0
    %168 = vmatprep.subr.mxu0 0.0
    %169 = vmatpush1.msra.mxu0 0.0
    %170 = vmatprep.subr.mxu0 0.0
    %171 = vmatpush1.msra.mxu0 0.0
    %172 = vmatprep.subr.mxu0 0.0
    %173 = vmatpush1.msra.mxu0 0.0
    %174 = vmatprep.mubr.f32.mxu0 0.0
    %175 = vmatmul.mubr.f32.gmra.mrb[0].mxu0 %v109
    %v176 = vpop.f32.mrb[0].mxu0
    %v177 = vadd.f32 0.0, %v176
    %v178 = vpop.f32.mrb[0].mxu0
    %179 = vdwg.mxu0
    %v180 = vmul.f32 %v177, 0.03125
    %v181 = vadd.f32 %v180, 1e-05
    %v182 = vrsqrt.pop %v181
    %v183 = vmul.f32 %v24, %v182
    %v184 = vld [vmem:[%s1] sm:$0x1]
    %v186 = vlaneseq
    %v187 = vshrl.u32 %v186, 7
    %v188 = vsub.s32 0, %v187
    %v189 = vrot.slane %v184, %v188
    %v191 = vmul.f32 %v183, %v189
    %192 = vst [vmem:[#allocation5] sm:$0xf] %v191
    // Predicated region
    $region14: #{tpu_custom_call.1} parent=1 // pred_check
      _
    $region15: #{tpu_custom_call.1} parent=1 // pred_check_branch
      %194 = sbr.rel (0) target = $region17
    $region16: #{tpu_custom_call.1} parent=1 // pred_region
      %s196 = ssub.s32 64, 64
      %197 = vsyncadd [#allocation4], %s196
      %s199 = sshll.u32 [#allocation5], 4
      %s200 = int_to_ptr.vmem [resolvable:$true] %s199
      %202 = dma.vmem_to_hbm [thread:$0]  %s200, 64, %s2, [#allocation4]
    $region17: #{tpu_custom_call.1} parent=1 // pred_fallthru
      _
    // Predicated region
    $region18: #{tpu_custom_call.1} parent=1 // pred_check
      _
    $region19: #{tpu_custom_call.1} parent=1 // pred_check_branch
      %204 = sbr.rel (0) target = $region21
    $region20: #{tpu_custom_call.1} parent=1 // pred_region
      %205 = dma.done [#allocation4], 64
    $region21: #{tpu_custom_call.1} parent=1 // pred_fallthru
      _
    %206 = vsyncpa [#allocation3], 1
    %207 = vsyncpa [#allocation4], 1

</llo_original>
